<compile_context>
chip_gen: v6e
topology: v6e:2x2x1
jax: 0.10.0
libtpu: 0.0.40
codegen_flags: <defaults>
</compile_context>

<pallas_src>
import jax
import jax.numpy as jnp
from jax.experimental import pallas as pl
from jax.experimental.pallas import tpu as pltpu

_LANES = 128            # TPU lane width (last dim of the packed layout)
_SUBLANE = 8            # sublane granularity for f32
_DEFAULT_BLOCK_ROWS = 2048  # 2048 x 128 x 4B = 1 MiB per array per step


def _sampling_kernel(z_mean_ref, z_log_var_ref, eps_ref, out_ref):
    # out = z_mean + exp(0.5 * z_log_var) * eps   (elementwise: EUP exp + VPU FMA)
    out_ref[...] = (
        z_mean_ref[...] + jnp.exp(0.5 * z_log_var_ref[...]) * eps_ref[...]
    )


def sampling_forward(z_mean, z_log_var, eps, *, max_block_rows=_DEFAULT_BLOCK_ROWS):
    """Pallas wrapper. z_mean, z_log_var, eps: same shape (e.g. (B, D)), float dtype."""
    assert z_mean.shape == z_log_var.shape == eps.shape
    orig_shape = z_mean.shape
    dtype = z_mean.dtype

    n = z_mean.size
    rows = pl.cdiv(n, _LANES)                                   # lane-packed row count
    rows_rounded = pl.cdiv(rows, _SUBLANE) * _SUBLANE           # sublane-align
    block_rows = min(max_block_rows, rows_rounded)              # multiple of 8 by construction
    padded_rows = pl.cdiv(rows_rounded, block_rows) * block_rows
    padded_n = padded_rows * _LANES
    grid = (padded_rows // block_rows,)

    def _pack(x):
        flat = jnp.ravel(x)
        flat = jnp.pad(flat, (0, padded_n - n))
        return flat.reshape(padded_rows, _LANES)

    zm, zlv, ep = _pack(z_mean), _pack(z_log_var), _pack(eps)

    spec = pl.BlockSpec((block_rows, _LANES), lambda i: (i, 0))

    packed_out = pl.pallas_call(
        _sampling_kernel,
        out_shape=jax.ShapeDtypeStruct((padded_rows, _LANES), dtype),
        grid=grid,
        in_specs=[spec, spec, spec],
        out_specs=spec,
        compiler_params=pltpu.CompilerParams(
            dimension_semantics=("parallel",),   # shards across TCs on v7x when grid >= 2
        ),
    )(zm, zlv, ep)

    return packed_out.reshape(-1)[:n].reshape(orig_shape)


def _reference(z_mean, z_log_var, eps):
    return z_mean + jnp.exp(0.5 * z_log_var) * eps


if __name__ == "__main__":
    key = jax.random.PRNGKey(0)

    # --- case 1: small VAE-like latents (matches the torch module's typical use) ---
    B, D = 8, 32
    k_mean, k_logvar, k_eps, key = jax.random.split(key, 4)
    z_mean = jax.random.normal(k_mean, (B, D), dtype=jnp.float32)
    z_log_var = jax.random.normal(k_logvar, (B, D), dtype=jnp.float32) * 0.1
    eps = jax.random.normal(k_eps, (B, D), dtype=jnp.float32)  # epsilon ~ N(0,1), shape z_mean.shape[0:2]

    out = jax.block_until_ready(sampling_forward(z_mean, z_log_var, eps))
    assert out.shape == (B, D)
    assert jnp.allclose(out, _reference(z_mean, z_log_var, eps), atol=1e-6, rtol=1e-6)

    # --- case 2: larger shape, exercises padding + multi-step parallel grid ---
    B2, D2 = 512, 768   # 393216 elems -> 3072 lane-rows -> padded to 4096 -> grid=(2,)
    k_mean, k_logvar, k_eps, key = jax.random.split(key, 4)
    z_mean2 = jax.random.normal(k_mean, (B2, D2), dtype=jnp.float32)
    z_log_var2 = jax.random.normal(k_logvar, (B2, D2), dtype=jnp.float32) * 0.1
    eps2 = jax.random.normal(k_eps, (B2, D2), dtype=jnp.float32)

    out2 = jax.block_until_ready(sampling_forward(z_mean2, z_log_var2, eps2))
    assert out2.shape == (B2, D2)
    assert jnp.allclose(out2, _reference(z_mean2, z_log_var2, eps2), atol=1e-5, rtol=1e-5)

    # --- case 3: ragged size (total not a multiple of 128) to check the padding path ---
    B3, D3 = 7, 13
    k_mean, k_logvar, k_eps, key = jax.random.split(key, 4)
    z_mean3 = jax.random.normal(k_mean, (B3, D3), dtype=jnp.float32)
    z_log_var3 = jax.random.normal(k_logvar, (B3, D3), dtype=jnp.float32) * 0.1
    eps3 = jax.random.normal(k_eps, (B3, D3), dtype=jnp.float32)

    out3 = jax.block_until_ready(sampling_forward(z_mean3, z_log_var3, eps3))
    assert out3.shape == (B3, D3)
    assert jnp.allclose(out3, _reference(z_mean3, z_log_var3, eps3), atol=1e-6, rtol=1e-6)

    print("KERNEL_OK")
</pallas_src>

<mosaic_0001>
module attributes {stable_mosaic.version = 11 : i64} {
  func.func @_sampling_kernel(%arg0: i32, %arg1: memref<8x128xf32, #tpu.memory_space<vmem>>, %arg2: memref<8x128xf32, #tpu.memory_space<vmem>>, %arg3: memref<8x128xf32, #tpu.memory_space<vmem>>, %arg4: memref<8x128xf32, #tpu.memory_space<vmem>>) attributes {dimension_semantics = [#tpu.dimension_semantics<parallel>], iteration_bounds = array<i64: 1>, scalar_prefetch = 0 : i64, scratch_operands = 0 : i64, tpu.core_type = #tpu.core_type<tc>, window_params = [{transform_indices = @transform_0, window_bounds = array<i64: 8, 128>}, {transform_indices = @transform_1, window_bounds = array<i64: 8, 128>}, {transform_indices = @transform_2, window_bounds = array<i64: 8, 128>}, {transform_indices = @transform_3, window_bounds = array<i64: 8, 128>}]} {
    %c0 = arith.constant 0 : index
    %c0_0 = arith.constant 0 : index
    %0 = vector.load %arg1[%c0, %c0_0] : memref<8x128xf32, #tpu.memory_space<vmem>>, vector<8x128xf32>
    %c0_1 = arith.constant 0 : index
    %c0_2 = arith.constant 0 : index
    %1 = vector.load %arg2[%c0_1, %c0_2] : memref<8x128xf32, #tpu.memory_space<vmem>>, vector<8x128xf32>
    %cst = arith.constant 5.000000e-01 : f32
    %2 = vector.broadcast %cst : f32 to vector<8x128xf32>
    %3 = arith.mulf %2, %1 : vector<8x128xf32>
    %4 = math.exp %3 : vector<8x128xf32>
    %c0_3 = arith.constant 0 : index
    %c0_4 = arith.constant 0 : index
    %5 = vector.load %arg3[%c0_3, %c0_4] : memref<8x128xf32, #tpu.memory_space<vmem>>, vector<8x128xf32>
    %6 = arith.mulf %4, %5 : vector<8x128xf32>
    %7 = arith.addf %0, %6 : vector<8x128xf32>
    %c0_5 = arith.constant 0 : index
    %c0_6 = arith.constant 0 : index
    %8 = vector.load %arg4[%c0_5, %c0_6] : memref<8x128xf32, #tpu.memory_space<vmem>>, vector<8x128xf32>
    tpu.vector_store %arg4[%c0_5, %c0_6], %7 {strides = array<i32>} : memref<8x128xf32, #tpu.memory_space<vmem>>, vector<8x128xf32>,
    return
  }
  func.func @transform_0(%arg0: i32) -> (i32, i32) {
    %c0_i32 = arith.constant 0 : i32
    %c0_i32_0 = arith.constant 0 : i32
    return %arg0, %c0_i32 : i32, i32
  }
  func.func @transform_1(%arg0: i32) -> (i32, i32) {
    %c0_i32 = arith.constant 0 : i32
    %c0_i32_0 = arith.constant 0 : i32
    return %arg0, %c0_i32 : i32, i32
  }
  func.func @transform_2(%arg0: i32) -> (i32, i32) {
    %c0_i32 = arith.constant 0 : i32
    %c0_i32_0 = arith.constant 0 : i32
    return %arg0, %c0_i32 : i32, i32
  }
  func.func @transform_3(%arg0: i32) -> (i32, i32) {
    %c0_i32 = arith.constant 0 : i32
    %c0_i32_0 = arith.constant 0 : i32
    return %arg0, %c0_i32 : i32, i32
  }
}

</mosaic_0001>

<llo_original>
// kernel: tpu_custom_call.1
$region0: #{tpu_custom_call.1}
  #allocation0 [shape = 'u32[]', space=smem, size = 0x4, offset = 0x4, fixed_abs, tag = 'smem constant byte address 0x4 - core index']
  #allocation1 [shape = 'u32[144,128]{1,0:T(1,128)}', space=vmem, size = 0x12000, scoped, tag = 'internal scratch']
  %s0 = inlined_call_operand.hbm [shape: f32[8,128], index: 0, kind: input, shape index: {}]
  %s1 = inlined_call_operand.hbm [shape: f32[8,128], index: 1, kind: input, shape index: {}]
  %s2 = inlined_call_operand.hbm [shape: f32[8,128], index: 2, kind: input, shape index: {}]
  %s3 = inlined_call_operand.hbm [shape: f32[8,128], index: 3, kind: output, shape index: {}]
  %s4 = sld [smem:[#allocation0]]
  $region34: #{tpu_custom_call.1} parent=0
    _
  %s6 = ssub.s32 1, %s4
  %s7 = scalar_select 0, %s6, %s4
  $region1: #{tpu_custom_call.1} parent=0
    #allocation2 [shape = 'u8[4096]{0}', space=vmem, size = 0x1000, scoped, tag = 'input window, operand 0, single buffered']
    #allocation3 [shape = 's32[1]{0}', space=sflag, size = 0x4, scoped, tag = 'scoped memory for tpu_custom_call.1']
    #allocation4 [shape = 's32[1]{0}', space=sflag, size = 0x4, scoped, tag = 'scoped memory for tpu_custom_call.1']
    #allocation5 [shape = 'u8[4096]{0}', space=vmem, size = 0x1000, scoped, tag = 'input window, operand 1, single buffered']
    #allocation6 [shape = 's32[1]{0}', space=sflag, size = 0x4, scoped, tag = 'scoped memory for tpu_custom_call.1']
    #allocation7 [shape = 'u8[4096]{0}', space=vmem, size = 0x1000, scoped, tag = 'input window, operand 2, single buffered']
    #allocation8 [shape = 'u8[4096]{0}', space=vmem, size = 0x1000, scoped, tag = 'output window, operand 0, single buffered']
    %8 = vsyncpa [#allocation3], 0
    %9 = vsyncpa [#allocation6], 0
    %10 = vsyncpa [#allocation4], 0
    // Predicated region
    $region2: #{tpu_custom_call.1} parent=1 // pred_check
      _
    $region3: #{tpu_custom_call.1} parent=1 // pred_check_branch
      %12 = sbr.rel (0) target = $region5
    $region4: #{tpu_custom_call.1} parent=1 // pred_region
      %s14 = ssub.s32 128, 128
      %15 = vsyncadd [#allocation3], %s14
      %s17 = sshll.u32 [#allocation2], 4
      %s18 = int_to_ptr.vmem [resolvable:$true] %s17
      %20 = dma.hbm_to_vmem [thread:$0]  %s0, 128, %s18, [#allocation3]
    $region5: #{tpu_custom_call.1} parent=1 // pred_fallthru
      _
    // Predicated region
    $region6: #{tpu_custom_call.1} parent=1 // pred_check
      _
    $region7: #{tpu_custom_call.1} parent=1 // pred_check_branch
      %22 = sbr.rel (0) target = $region9
    $region8: #{tpu_custom_call.1} parent=1 // pred_region
      %s24 = ssub.s32 128, 128
      %25 = vsyncadd [#allocation6], %s24
      %s27 = sshll.u32 [#allocation5], 4
      %s28 = int_to_ptr.vmem [resolvable:$true] %s27
      %30 = dma.hbm_to_vmem [thread:$0]  %s1, 128, %s28, [#allocation6]
    $region9: #{tpu_custom_call.1} parent=1 // pred_fallthru
      _
    // Predicated region
    $region10: #{tpu_custom_call.1} parent=1 // pred_check
      _
    $region11: #{tpu_custom_call.1} parent=1 // pred_check_branch
      %32 = sbr.rel (0) target = $region13
    $region12: #{tpu_custom_call.1} parent=1 // pred_region
      %s34 = ssub.s32 128, 128
      %35 = vsyncadd [#allocation6], %s34
      %s37 = sshll.u32 [#allocation7], 4
      %s38 = int_to_ptr.vmem [resolvable:$true] %s37
      %40 = dma.hbm_to_vmem [thread:$0]  %s2, 128, %s38, [#allocation6]
    $region13: #{tpu_custom_call.1} parent=1 // pred_fallthru
      _
    // Predicated region
    $region14: #{tpu_custom_call.1} parent=1 // pred_check
      _
    $region15: #{tpu_custom_call.1} parent=1 // pred_check_branch
      %42 = sbr.rel (0) target = $region17
    $region16: #{tpu_custom_call.1} parent=1 // pred_region
      %43 = dma.done [#allocation3], 128
    $region17: #{tpu_custom_call.1} parent=1 // pred_fallthru
      _
    // Predicated region
    $region18: #{tpu_custom_call.1} parent=1 // pred_check
      _
    $region19: #{tpu_custom_call.1} parent=1 // pred_check_branch
      %45 = sbr.rel (0) target = $region21
    $region20: #{tpu_custom_call.1} parent=1 // pred_region
      %46 = dma.done [#allocation6], 128
    $region21: #{tpu_custom_call.1} parent=1 // pred_fallthru
      _
    // Predicated region
    $region22: #{tpu_custom_call.1} parent=1 // pred_check
      _
    $region23: #{tpu_custom_call.1} parent=1 // pred_check_branch
      %48 = sbr.rel (0) target = $region25
    $region24: #{tpu_custom_call.1} parent=1 // pred_region
      %49 = dma.done [#allocation6], 128
    $region25: #{tpu_custom_call.1} parent=1 // pred_fallthru
      _
    %v50 = vld [vmem:[#allocation2] sm:$0xff]
    %v51 = vld [vmem:[#allocation5] sm:$0xff]
    %v52 = vmul.f32 %v51, 0.5
    %v53 = vmul.f32 %v52, 1.442695
    %v54 = vpow.pop %v53
    %v55 = vld [vmem:[#allocation7] sm:$0xff]
    %v56 = vmul.f32 %v54, %v55
    %v57 = vadd.f32 %v50, %v56
    %58 = vst [vmem:[#allocation8] sm:$0xff] %v57
    // Predicated region
    $region26: #{tpu_custom_call.1} parent=1 // pred_check
      _
    $region27: #{tpu_custom_call.1} parent=1 // pred_check_branch
      %60 = sbr.rel (0) target = $region29
    $region28: #{tpu_custom_call.1} parent=1 // pred_region
      %s62 = ssub.s32 128, 128
      %63 = vsyncadd [#allocation4], %s62
      %s65 = sshll.u32 [#allocation8], 4
      %s66 = int_to_ptr.vmem [resolvable:$true] %s65
      %68 = dma.vmem_to_hbm [thread:$0]  %s66, 128, %s3, [#allocation4]
    $region29: #{tpu_custom_call.1} parent=1 // pred_fallthru
      _
    // Predicated region
    $region30: #{tpu_custom_call.1} parent=1 // pred_check
      _
    $region31: #{tpu_custom_call.1} parent=1 // pred_check_branch
      %70 = sbr.rel (0) target = $region33
    $region32: #{tpu_custom_call.1} parent=1 // pred_region
      %71 = dma.done [#allocation4], 128
    $region33: #{tpu_custom_call.1} parent=1 // pred_fallthru
      _
    %72 = vsyncpa [#allocation3], 1
    %73 = vsyncpa [#allocation6], 1
    %74 = vsyncpa [#allocation4], 1

</llo_original>
